<compile_context>
chip_gen: v7x
topology: tpu7x:2x2x1
jax: 0.10.0
libtpu: 0.0.40
codegen_flags: <defaults>
</compile_context>

<pallas_src>
import jax
import jax.numpy as jnp
from jax.experimental import pallas as pl
from jax.experimental.pallas import tpu as pltpu


def _round_up(n, m):
    return (n + m - 1) // m * m


# --------------------------------------------------------------------------- kernel
def _net_more_kernel(x_ref, wp_ref, bp_ref, wf_ref, bf_ref, wl_ref, bl_ref,
                     out_ref, xint_ref, acc_ref):
    """Grid = (batch tiles, K tiles over d_in).

    Layer 1 (previous_model feature extractor) accumulates over the K axis into an
    f32 VMEM scratch; layers 2/3 + output stores run only on the last K step.
    """
    k = pl.program_id(1)

    @pl.when(k == 0)
    def _():
        acc_ref[...] = jnp.zeros_like(acc_ref)

    # previous_model layer-1 partial matmul (bf16 MXU inputs, f32 accumulate).
    acc_ref[...] += jnp.dot(
        x_ref[...].astype(jnp.bfloat16), wp_ref[...],
        preferred_element_type=jnp.float32)

    @pl.when(k == pl.num_programs(1) - 1)
    def _():
        feat = jnp.maximum(acc_ref[...] + bp_ref[...], 0.0)          # prev-model ReLU
        x_internal = jnp.maximum(                                    # relu(fc(feat))
            jnp.dot(feat.astype(jnp.bfloat16), wf_ref[...],
                    preferred_element_type=jnp.float32) + bf_ref[...],
            0.0)
        logits = (jnp.dot(x_internal.astype(jnp.bfloat16), wl_ref[...],  # lastfc
                          preferred_element_type=jnp.float32)
                  + bl_ref[...])
        out_ref[...] = logits.astype(out_ref.dtype)
        xint_ref[...] = x_internal.astype(xint_ref.dtype)


# ------------------------------------------------------------------- one-time prep
def prepare_net_more_params(params):
    """One-time weight prep: pad to 128-lane multiples, transpose [out,in]->[in,out],
    cast matmul operands to bf16.  Reuse the result across forward calls."""
    f_prev, d_in = params["w_prev"].shape
    f_out = params["w_fc"].shape[0]
    n_cls = params["w_last"].shape[0]

    d_in_p = _round_up(d_in, 128)
    f_prev_p = _round_up(f_prev, 128)
    f_out_p = _round_up(f_out, 128)
    n_cls_p = _round_up(n_cls, 128)

    def pad_w(w, rows, cols):
        wt = jnp.asarray(w, jnp.float32).T
        out = jnp.zeros((rows, cols), jnp.float32).at[:wt.shape[0], :wt.shape[1]].set(wt)
        return out.astype(jnp.bfloat16)

    def pad_b(b, cols):
        b = jnp.asarray(b, jnp.float32)
        return jnp.zeros((1, cols), jnp.float32).at[0, :b.shape[0]].set(b)

    return {
        "wp": pad_w(params["w_prev"], d_in_p, f_prev_p),
        "bp": pad_b(params["b_prev"], f_prev_p),
        "wf": pad_w(params["w_fc"], f_prev_p, f_out_p),
        "bf": pad_b(params["b_fc"], f_out_p),
        "wl": pad_w(params["w_last"], f_out_p, n_cls_p),
        "bl": pad_b(params["b_last"], n_cls_p),
        "dims": (d_in, f_prev, f_out, n_cls),
        "pdims": (d_in_p, f_prev_p, f_out_p, n_cls_p),
    }


# ------------------------------------------------------------------ tile heuristics
def _pick_tm(B):
    """Largest batch tile <= 512 that keeps >= 2 grid steps (v7x has 2 TensorCores)
    with <= 12.5% dead padded rows; otherwise a single full-batch tile."""
    b8 = _round_up(max(B, 8), 8)
    for cand in (512, 256, 128, 64, 32, 16, 8):
        b_p = _round_up(b8, cand)
        if b_p // cand >= 2 and (b_p - b8) * 8 <= b8:
            return cand
    return min(b8, 512)


def _pick_tk(d_in_p, f_prev_p, budget_bytes=16 * 2**20):
    """Keep Wp fully VMEM-resident if it is small; otherwise stream K blocks
    (double-buffered) so the layout also fits v7x's 64 MiB VMEM."""
    if d_in_p * f_prev_p * 2 <= budget_bytes:
        return d_in_p
    per_block = budget_bytes // 4
    for cand in range(d_in_p, 0, -128):
        if d_in_p % cand == 0 and cand * f_prev_p * 2 <= per_block:
            return cand
    return 128


# ------------------------------------------------------------------------- forward
def net_more_forward(x_nchw, prep, *, tm=None, tk=None,
                     logits_dtype=jnp.float32, xint_dtype=jnp.bfloat16):
    """Runs the Net_more forward pass. Returns (output, x_internal)."""
    B = x_nchw.shape[0]
    d_in, f_prev, f_out, n_cls = prep["dims"]
    d_in_p, f_prev_p, f_out_p, n_cls_p = prep["pdims"]

    x2d = x_nchw.reshape(B, -1)                      # glue: flatten NCHW -> [B, D_in]
    assert x2d.shape[1] == d_in

    if tm is None:
        tm = _pick_tm(B)
    tm = _round_up(min(tm, _round_up(B, 8)), 8)
    b_p = _round_up(B, tm)

    if tk is None:
        tk = _pick_tk(d_in_p, f_prev_p)
    n_k = d_in_p // tk

    # Fast path: no wrapper-side copy of x when it is already tile aligned — the
    # kernel casts the streamed tile to bf16 itself.
    if b_p == B and d_in_p == d_in:
        x_in = x2d
    else:
        x_in = (jnp.zeros((b_p, d_in_p), jnp.float32)
                .at[:B, :d_in].set(x2d.astype(jnp.float32)).astype(jnp.bfloat16))
    x_item = jnp.dtype(x_in.dtype).itemsize

    out_item = jnp.dtype(logits_dtype).itemsize
    xint_item = jnp.dtype(xint_dtype).itemsize

    # Explicit VMEM budget from actual buffer sizes (+headroom), clamped for v7x.
    wp_bufs = 2 if n_k > 1 else 1
    vmem_bytes = (
        2 * tm * tk * x_item                         # x tiles (double-buffered)
        + wp_bufs * tk * f_prev_p * 2                # Wp blocks
        + (f_prev_p + f_out_p + n_cls_p) * 4         # biases (1 buffer each)
        + f_prev_p * f_out_p * 2                     # Wf (resident)
        + f_out_p * n_cls_p * 2                      # Wl (resident)
        + 2 * tm * n_cls_p * out_item                # logits tiles
        + 2 * tm * f_out_p * xint_item               # x_internal tiles
        + tm * f_prev_p * 4)                         # acc scratch
    vmem_limit = min(max(int(vmem_bytes * 1.5) + (4 << 20), 16 << 20), 64 << 20)

    flops = 2 * b_p * (d_in_p * f_prev_p + f_prev_p * f_out_p + f_out_p * n_cls_p)
    bytes_accessed = (
        b_p * d_in_p * x_item
        + (d_in_p * f_prev_p + f_prev_p * f_out_p + f_out_p * n_cls_p) * 2
        + (f_prev_p + f_out_p + n_cls_p) * 4
        + b_p * n_cls_p * out_item
        + b_p * f_out_p * xint_item)

    def const_spec(shape):
        # VMEM-resident: constant index_map + single buffer (no dead 2nd buffer).
        return pl.BlockSpec(shape, lambda i, k: (0, 0), pipeline_mode=pl.Buffered(1))

    wp_spec = pl.BlockSpec(
        (tk, f_prev_p), lambda i, k: (k, 0),
        pipeline_mode=pl.Buffered(1) if n_k == 1 else None)

    grid = (b_p // tm, n_k)
    out_shape = (
        jax.ShapeDtypeStruct((b_p, n_cls_p), logits_dtype),   # padded logits
        jax.ShapeDtypeStruct((b_p, f_out_p), xint_dtype),     # padded x_internal
    )

    fn = pl.pallas_call(
        _net_more_kernel,
        out_shape=out_shape,
        grid=grid,
        in_specs=[
            pl.BlockSpec((tm, tk), lambda i, k: (i, k)),      # x tile (pipelined)
            wp_spec,                                          # Wp
            const_spec((1, f_prev_p)),                        # bp
            const_spec((f_prev_p, f_out_p)),                  # Wf
            const_spec((1, f_out_p)),                         # bf
            const_spec((f_out_p, n_cls_p)),                   # Wl
            const_spec((1, n_cls_p)),                         # bl
        ],
        out_specs=(
            pl.BlockSpec((tm, n_cls_p), lambda i, k: (i, 0)),
            pl.BlockSpec((tm, f_out_p), lambda i, k: (i, 0)),
        ),
        scratch_shapes=[pltpu.VMEM((tm, f_prev_p), jnp.float32)],
        compiler_params=pltpu.CompilerParams(
            dimension_semantics=("parallel", "arbitrary"),
            vmem_limit_bytes=vmem_limit),
        cost_estimate=pl.CostEstimate(
            flops=flops, transcendentals=0, bytes_accessed=bytes_accessed),
    )
    out_p, xint_p = fn(x_in, prep["wp"], prep["bp"], prep["wf"], prep["bf"],
                       prep["wl"], prep["bl"])

    # Slice the zero padding back off (glue).
    return out_p[:B, :n_cls], xint_p[:B, :f_out]


# ----------------------------------------------------------------- reference / demo
def _init_params(key, d_in, input_features, out_features, class_num):
    """Deterministic synthetic parameters in PyTorch Linear convention [out, in]."""
    ks = jax.random.split(key, 6)
    scale = 0.05
    return {
        "w_prev": scale * jax.random.normal(ks[0], (input_features, d_in), jnp.float32),
        "b_prev": scale * jax.random.normal(ks[1], (input_features,), jnp.float32),
        "w_fc":   scale * jax.random.normal(ks[2], (out_features, input_features), jnp.float32),
        "b_fc":   scale * jax.random.normal(ks[3], (out_features,), jnp.float32),
        "w_last": scale * jax.random.normal(ks[4], (class_num, out_features), jnp.float32),
        "b_last": scale * jax.random.normal(ks[5], (class_num,), jnp.float32),
    }


def _reference(x_nchw, params):
    """Pure-JAX reference mirroring the PyTorch forward with the same bf16 matmul
    inputs / f32 accumulation as the kernel."""
    x = x_nchw.reshape(x_nchw.shape[0], -1).astype(jnp.float32)

    def mm(a, w):
        return jnp.dot(a.astype(jnp.bfloat16), w.T.astype(jnp.bfloat16),
                       preferred_element_type=jnp.float32)

    feat = jnp.maximum(mm(x, params["w_prev"]) + params["b_prev"], 0.0)
    x_internal = jnp.maximum(mm(feat, params["w_fc"]) + params["b_fc"], 0.0)
    output = mm(x_internal, params["w_last"]) + params["b_last"]
    return output, x_internal


if __name__ == "__main__":
    # Small CIFAR-like shapes; d_in = C*H*W = 384 is already a 128 multiple, so the
    # x fast path (no wrapper-side pad/cast of x) is exercised.
    B, C, H, W = 32, 3, 8, 16
    d_in = C * H * W
    input_features = 256        # previous model's feature width == fc input_features
    out_features = 128
    class_num = 10

    key = jax.random.PRNGKey(0)
    kx, kp = jax.random.split(key)
    x = jax.random.normal(kx, (B, C, H, W), jnp.float32)
    params = _init_params(kp, d_in, input_features, out_features, class_num)

    prep = prepare_net_more_params(params)          # one-time weight prep
    ref_out, ref_int = _reference(x, params)

    # Path 1: resident Wp (n_k == 1); tm auto-picked (16 -> grid (2, 1)).
    output, x_internal = net_more_forward(x, prep)
    jax.block_until_ready((output, x_internal))
    assert output.shape == (B, class_num) and x_internal.shape == (B, out_features)
    assert jnp.allclose(output, ref_out, atol=3e-3, rtol=3e-3)
    assert jnp.allclose(x_internal.astype(jnp.float32), ref_int, atol=2e-2, rtol=2e-2)

    # Path 2: streamed-K fallback (tk=128 -> 3 K steps), as used on v7x for large Wp.
    output2, x_internal2 = net_more_forward(x, prep, tm=16, tk=128)
    jax.block_until_ready((output2, x_internal2))
    assert jnp.allclose(output2, ref_out, atol=3e-3, rtol=3e-3)
    assert jnp.allclose(x_internal2.astype(jnp.float32), ref_int, atol=2e-2, rtol=2e-2)

    print("KERNEL_OK")
</pallas_src>

<mosaic_0001>
module attributes {stable_mosaic.version = 11 : i64} {
  func.func @_net_more_kernel(%arg0: i32, %arg1: i32, %arg2: memref<16x384xf32, #tpu.memory_space<vmem>>, %arg3: memref<384x256xbf16, #tpu.memory_space<vmem>>, %arg4: memref<1x256xf32, #tpu.memory_space<vmem>>, %arg5: memref<256x128xbf16, #tpu.memory_space<vmem>>, %arg6: memref<1x128xf32, #tpu.memory_space<vmem>>, %arg7: memref<128x128xbf16, #tpu.memory_space<vmem>>, %arg8: memref<1x128xf32, #tpu.memory_space<vmem>>, %arg9: memref<16x128xf32, #tpu.memory_space<vmem>>, %arg10: memref<16x128xbf16, #tpu.memory_space<vmem>>, %arg11: memref<16x256xf32, #tpu.memory_space<vmem>>) attributes {dimension_semantics = [#tpu.dimension_semantics<parallel>, #tpu.dimension_semantics<arbitrary>], iteration_bounds = array<i64: 2, 1>, scalar_prefetch = 0 : i64, scratch_operands = 1 : i64, tpu.core_type = #tpu.core_type<tc>, window_params = [{transform_indices = @transform_0, window_bounds = array<i64: 16, 384>}, {pipeline_mode = #tpu.pipeline_mode<synchronous>, transform_indices = @transform_1, window_bounds = array<i64: 384, 256>}, {pipeline_mode = #tpu.pipeline_mode<synchronous>, transform_indices = @transform_2, window_bounds = array<i64: 1, 256>}, {pipeline_mode = #tpu.pipeline_mode<synchronous>, transform_indices = @transform_3, window_bounds = array<i64: 256, 128>}, {pipeline_mode = #tpu.pipeline_mode<synchronous>, transform_indices = @transform_4, window_bounds = array<i64: 1, 128>}, {pipeline_mode = #tpu.pipeline_mode<synchronous>, transform_indices = @transform_5, window_bounds = array<i64: 128, 128>}, {pipeline_mode = #tpu.pipeline_mode<synchronous>, transform_indices = @transform_6, window_bounds = array<i64: 1, 128>}, {transform_indices = @transform_7, window_bounds = array<i64: 16, 128>}, {transform_indices = @transform_8, window_bounds = array<i64: 16, 128>}]} {
    %c0_i32 = arith.constant 0 : i32
    %0 = arith.cmpi eq, %arg1, %c0_i32 : i32
    %1 = arith.extui %0 : i1 to i32
    %c0_i32_0 = arith.constant 0 : i32
    %2 = arith.cmpi ne, %1, %c0_i32_0 : i32
    scf.if %2 {
      %cst_10 = arith.constant 0.000000e+00 : f32
      %13 = vector.broadcast %cst_10 : f32 to vector<16x256xf32>
      %c0_11 = arith.constant 0 : index
      %c0_12 = arith.constant 0 : index
      %14 = vector.load %arg11[%c0_11, %c0_12] : memref<16x256xf32, #tpu.memory_space<vmem>>, vector<16x256xf32>
      tpu.vector_store %arg11[%c0_11, %c0_12], %13 {strides = array<i32>} : memref<16x256xf32, #tpu.memory_space<vmem>>, vector<16x256xf32>,
    } else {
    }
    %c0 = arith.constant 0 : index
    %c0_1 = arith.constant 0 : index
    %3 = vector.load %arg11[%c0, %c0_1] : memref<16x256xf32, #tpu.memory_space<vmem>>, vector<16x256xf32>
    %c0_2 = arith.constant 0 : index
    %c0_3 = arith.constant 0 : index
    %4 = vector.load %arg2[%c0_2, %c0_3] : memref<16x384xf32, #tpu.memory_space<vmem>>, vector<16x384xf32>
    %5 = arith.truncf %4 : vector<16x384xf32> to vector<16x384xbf16>
    %c0_4 = arith.constant 0 : index
    %c0_5 = arith.constant 0 : index
    %6 = vector.load %arg3[%c0_4, %c0_5] : memref<384x256xbf16, #tpu.memory_space<vmem>>, vector<384x256xbf16>
    %cst = arith.constant dense<0.000000e+00> : vector<16x256xf32>
    %7 = tpu.matmul %5, %6, %cst {dimension_numbers = #tpu.dot_dimension_numbers<[1], [0], [0], [1], [0, 0, 1, 1], [], []>} : vector<16x384xbf16>, vector<384x256xbf16>, vector<16x256xf32> -> vector<16x256xf32>
    %8 = arith.addf %3, %7 : vector<16x256xf32>
    %c0_6 = arith.constant 0 : index
    %c0_7 = arith.constant 0 : index
    %9 = vector.load %arg11[%c0_6, %c0_7] : memref<16x256xf32, #tpu.memory_space<vmem>>, vector<16x256xf32>
    tpu.vector_store %arg11[%c0_6, %c0_7], %8 {strides = array<i32>} : memref<16x256xf32, #tpu.memory_space<vmem>>, vector<16x256xf32>,
    %c0_i32_8 = arith.constant 0 : i32
    %10 = arith.cmpi eq, %arg1, %c0_i32_8 : i32
    %11 = arith.extui %10 : i1 to i32
    %c0_i32_9 = arith.constant 0 : i32
    %12 = arith.cmpi ne, %11, %c0_i32_9 : i32
    scf.if %12 {
      %c0_10 = arith.constant 0 : index
      %c0_11 = arith.constant 0 : index
      %13 = vector.load %arg11[%c0_10, %c0_11] : memref<16x256xf32, #tpu.memory_space<vmem>>, vector<16x256xf32>
      %c0_12 = arith.constant 0 : index
      %c0_13 = arith.constant 0 : index
      %14 = vector.load %arg4[%c0_12, %c0_13] : memref<1x256xf32, #tpu.memory_space<vmem>>, vector<1x256xf32>
      %15 = vector.broadcast %14 : vector<1x256xf32> to vector<16x256xf32>
      %16 = arith.addf %13, %15 : vector<16x256xf32>
      %cst_14 = arith.constant 0.000000e+00 : f32
      %17 = vector.broadcast %cst_14 : f32 to vector<16x256xf32>
      %18 = arith.maximumf %16, %17 : vector<16x256xf32>
      %19 = arith.truncf %18 : vector<16x256xf32> to vector<16x256xbf16>
      %c0_15 = arith.constant 0 : index
      %c0_16 = arith.constant 0 : index
      %20 = vector.load %arg5[%c0_15, %c0_16] : memref<256x128xbf16, #tpu.memory_space<vmem>>, vector<256x128xbf16>
      %cst_17 = arith.constant dense<0.000000e+00> : vector<16x128xf32>
      %21 = tpu.matmul %19, %20, %cst_17 {dimension_numbers = #tpu.dot_dimension_numbers<[1], [0], [0], [1], [0, 0, 1, 1], [], []>} : vector<16x256xbf16>, vector<256x128xbf16>, vector<16x128xf32> -> vector<16x128xf32>
      %c0_18 = arith.constant 0 : index
      %c0_19 = arith.constant 0 : index
      %22 = vector.load %arg6[%c0_18, %c0_19] : memref<1x128xf32, #tpu.memory_space<vmem>>, vector<1x128xf32>
      %23 = vector.broadcast %22 : vector<1x128xf32> to vector<16x128xf32>
      %24 = arith.addf %21, %23 : vector<16x128xf32>
      %cst_20 = arith.constant 0.000000e+00 : f32
      %25 = vector.broadcast %cst_20 : f32 to vector<16x128xf32>
      %26 = arith.maximumf %24, %25 : vector<16x128xf32>
      %27 = arith.truncf %26 : vector<16x128xf32> to vector<16x128xbf16>
      %c0_21 = arith.constant 0 : index
      %c0_22 = arith.constant 0 : index
      %28 = vector.load %arg7[%c0_21, %c0_22] : memref<128x128xbf16, #tpu.memory_space<vmem>>, vector<128x128xbf16>
      %cst_23 = arith.constant dense<0.000000e+00> : vector<16x128xf32>
      %29 = tpu.matmul %27, %28, %cst_23 {dimension_numbers = #tpu.dot_dimension_numbers<[1], [0], [0], [1], [0, 0, 1, 1], [], []>} : vector<16x128xbf16>, vector<128x128xbf16>, vector<16x128xf32> -> vector<16x128xf32>
      %c0_24 = arith.constant 0 : index
      %c0_25 = arith.constant 0 : index
      %30 = vector.load %arg8[%c0_24, %c0_25] : memref<1x128xf32, #tpu.memory_space<vmem>>, vector<1x128xf32>
      %31 = vector.broadcast %30 : vector<1x128xf32> to vector<16x128xf32>
      %32 = arith.addf %29, %31 : vector<16x128xf32>
      %c0_26 = arith.constant 0 : index
      %c0_27 = arith.constant 0 : index
      %33 = vector.load %arg9[%c0_26, %c0_27] : memref<16x128xf32, #tpu.memory_space<vmem>>, vector<16x128xf32>
      tpu.vector_store %arg9[%c0_26, %c0_27], %32 {strides = array<i32>} : memref<16x128xf32, #tpu.memory_space<vmem>>, vector<16x128xf32>,
      %34 = arith.truncf %26 : vector<16x128xf32> to vector<16x128xbf16>
      %c0_28 = arith.constant 0 : index
      %c0_29 = arith.constant 0 : index
      %35 = vector.load %arg10[%c0_28, %c0_29] : memref<16x128xbf16, #tpu.memory_space<vmem>>, vector<16x128xbf16>
      tpu.vector_store %arg10[%c0_28, %c0_29], %34 {strides = array<i32>} : memref<16x128xbf16, #tpu.memory_space<vmem>>, vector<16x128xbf16>,
    } else {
    }
    return
  }
  func.func @transform_0(%arg0: i32, %arg1: i32) -> (i32, i32) {
    %c0_i32 = arith.constant 0 : i32
    return %arg0, %arg1 : i32, i32
  }
  func.func @transform_1(%arg0: i32, %arg1: i32) -> (i32, i32) {
    %c0_i32 = arith.constant 0 : i32
    %c0_i32_0 = arith.constant 0 : i32
    return %arg1, %c0_i32 : i32, i32
  }
  func.func @transform_2(%arg0: i32, %arg1: i32) -> (i32, i32) {
    %c0_i32 = arith.constant 0 : i32
    %c0_i32_0 = arith.constant 0 : i32
    %c0_i32_1 = arith.constant 0 : i32
    return %c0_i32, %c0_i32_0 : i32, i32
  }
  func.func @transform_3(%arg0: i32, %arg1: i32) -> (i32, i32) {
    %c0_i32 = arith.constant 0 : i32
    %c0_i32_0 = arith.constant 0 : i32
    %c0_i32_1 = arith.constant 0 : i32
    return %c0_i32, %c0_i32_0 : i32, i32
  }
  func.func @transform_4(%arg0: i32, %arg1: i32) -> (i32, i32) {
    %c0_i32 = arith.constant 0 : i32
    %c0_i32_0 = arith.constant 0 : i32
    %c0_i32_1 = arith.constant 0 : i32
    return %c0_i32, %c0_i32_0 : i32, i32
  }
  func.func @transform_5(%arg0: i32, %arg1: i32) -> (i32, i32) {
    %c0_i32 = arith.constant 0 : i32
    %c0_i32_0 = arith.constant 0 : i32
    %c0_i32_1 = arith.constant 0 : i32
    return %c0_i32, %c0_i32_0 : i32, i32
  }
  func.func @transform_6(%arg0: i32, %arg1: i32) -> (i32, i32) {
    %c0_i32 = arith.constant 0 : i32
    %c0_i32_0 = arith.constant 0 : i32
    %c0_i32_1 = arith.constant 0 : i32
    return %c0_i32, %c0_i32_0 : i32, i32
  }
  func.func @transform_7(%arg0: i32, %arg1: i32) -> (i32, i32) {
    %c0_i32 = arith.constant 0 : i32
    %c0_i32_0 = arith.constant 0 : i32
    return %arg0, %c0_i32 : i32, i32
  }
  func.func @transform_8(%arg0: i32, %arg1: i32) -> (i32, i32) {
    %c0_i32 = arith.constant 0 : i32
    %c0_i32_0 = arith.constant 0 : i32
    return %arg0, %c0_i32 : i32, i32
  }
}

</mosaic_0001>

<llo_original>
// kernel: tpu_custom_call.1
$region0: #{tpu_custom_call.1}
  #allocation0 [shape = 'u32[]', space=smem, size = 0x4, offset = 0x4, fixed_abs, tag = 'smem constant byte address 0x4 - core index']
  #allocation1 [shape = 'u32[144,128]{1,0:T(1,128)}', space=vmem, size = 0x12000, scoped, tag = 'internal scratch']
  #allocation2 [shape = 'f32[16,256]{1,0:T(8,128)}', space=vmem, size = 0x4000, scoped, tag = 'scratch operand']
  %s0 = inlined_call_operand.hbm [shape: f32[32,384], index: 0, kind: input, shape index: {}]
  %s1 = inlined_call_operand.hbm [shape: bf16[384,256], index: 1, kind: input, shape index: {}]
  %s2 = inlined_call_operand.vmem [shape: f32[1,256], index: 2, kind: input, shape index: {}]
  %s3 = inlined_call_operand.hbm [shape: bf16[256,128], index: 3, kind: input, shape index: {}]
  %s4 = inlined_call_operand.vmem [shape: f32[1,128], index: 4, kind: input, shape index: {}]
  %s5 = inlined_call_operand.hbm [shape: bf16[128,128], index: 5, kind: input, shape index: {}]
  %s6 = inlined_call_operand.vmem [shape: f32[1,128], index: 6, kind: input, shape index: {}]
  %s7 = inlined_call_operand.hbm [shape: f32[32,128], index: 7, kind: output, shape index: {0}]
  %s8 = inlined_call_operand.hbm [shape: bf16[32,128], index: 8, kind: output, shape index: {1}]
  %9 = xla_tuple %s7, %s8
  %s10 = sld [smem:[#allocation0]]
  $region93: #{tpu_custom_call.1} parent=0
    _
  %s12 = ssub.s32 1, %s10
  %s13 = scalar_select 0, %s12, %s10
  $region1: #{tpu_custom_call.1} parent=0
    #allocation3 [shape = 'u8[49152]{0}', space=vmem, size = 0xc000, scoped, tag = 'input window, operand 0']
    #allocation4 [shape = 's32[2]{0}', space=sflag, size = 0x8, scoped, tag = 'scoped memory for tpu_custom_call.1']
    #allocation5 [shape = 's32[2]{0}', space=sflag, size = 0x8, scoped, tag = 'scoped memory for tpu_custom_call.1']
    #allocation6 [shape = 'u8[196608]{0}', space=vmem, size = 0x30000, scoped, tag = 'input window, operand 1, single buffered']
    #allocation7 [shape = 's32[1]{0}', space=sflag, size = 0x4, scoped, tag = 'scoped memory for tpu_custom_call.1']
    #allocation8 [shape = 'u8[65536]{0}', space=vmem, size = 0x10000, scoped, tag = 'input window, operand 3, single buffered']
    #allocation9 [shape = 'u8[32768]{0}', space=vmem, size = 0x8000, scoped, tag = 'input window, operand 5, single buffered']
    #allocation10 [shape = 's32[1]{0}', space=sflag, size = 0x4, scoped, tag = 'scoped memory for tpu_custom_call.1']
    #allocation11 [shape = 'u8[16384]{0}', space=vmem, size = 0x4000, scoped, tag = 'output window, operand 0']
    #allocation12 [shape = 'u8[8192]{0}', space=vmem, size = 0x2000, scoped, tag = 'output window, operand 1']
    #allocation13 [shape = 's32[2]{0}', space=sflag, size = 0x8, scoped, tag = 'scoped memory for tpu_custom_call.1']
    %14 = vsyncpa [#allocation4], 0
    %s15 = scalar_lea.sflag [#allocation4], 1
    %16 = vsyncpa %s15, 0
    %17 = vsyncpa [#allocation7], 0
    %18 = vsyncpa [#allocation10], 0
    %19 = vsyncpa [#allocation5], 0
    %s20 = scalar_lea.sflag [#allocation5], 1
    %21 = vsyncpa %s20, 0
    %22 = vsyncpa [#allocation13], 0
    %s23 = scalar_lea.sflag [#allocation13], 1
    %24 = vsyncpa %s23, 0
    loop: start=0, step=1, limit=4
    $region2: #{tpu_custom_call.1} parent=1 // loop_pre_header
      _
    $region3: #{tpu_custom_call.1} parent=1 // loop_header
      %s26 = sphi 0, %s30
      %p27 = scmp.ge.s32.totalorder %s26, 4
      %s33 = sphi 0, %s45
      %s34 = sphi 0, %s41
      %s35 = sphi 0, %s33
      %s36 = sphi 0, %s34
      %s37 = sphi 0, %s35
      %s38 = sphi 0, %s36
      %s50 = sphi 0, %s52
      %s53 = sphi 0, %s50
      %s54 = sphi 0, %s53
      %s70 = sphi 0, %s54
      %s76 = sphi 0, %s78
      %s79 = sphi 0, %s76
      %s80 = sphi 0, %s79
      %s96 = sphi 0, %s80
      %s100 = sphi 0, %s100
      %s102 = sphi 0, %s100
      %s103 = sphi 0, %s102
      %s117 = sphi 0, %s103
      %s121 = sphi 0, %s121
      %s123 = sphi 0, %s121
      %s124 = sphi 0, %s123
      %s138 = sphi 0, %s124
      %s142 = sphi 0, %s142
      %s144 = sphi 0, %s142
      %s145 = sphi 0, %s144
      %s159 = sphi 0, %s145
      %s163 = sphi 0, %s163
      %s165 = sphi 0, %s163
      %s166 = sphi 0, %s165
      %s180 = sphi 0, %s166
      %s184 = sphi 0, %s184
      %s186 = sphi 0, %s184
      %s187 = sphi 0, %s186
      %s201 = sphi 0, %s187
      %s207 = sphi 0, %s209
      %s210 = sphi 0, %s207
      %s211 = sphi 0, %s210
      %s227 = sphi 0, %s211
      %s233 = sphi 0, %s235
      %s236 = sphi 0, %s233
      %s237 = sphi 0, %s236
      %s253 = sphi 0, %s237
    $region4: #{tpu_custom_call.1} parent=1 // loop_header_branch
      %29 = sbr.rel (%p27) target = $region8
    $region5: #{tpu_custom_call.1} parent=1 // loop_body
      %s31 = ssub.s32 %s26, 1
      %s32 = ssub.s32 %s26, 2
      %s39 = sadd.s32 1, %s34
      %p40 = scmp.ge.s32.totalorder %s39, 1
      %s41 = scalar_select %p40, 0, %s39
      %s42 = sadd.s32 1, %s33
      %s43 = scalar_select %p40, %s42, %s33
      %p44 = scmp.ge.s32.totalorder %s43, 2
      %s45 = scalar_select %p44, 0, %s43
      %s46 = ssub.s32 %s33, %s45
      %s47 = ssub.s32 %s34, %s41
      %s48 = sor.u32 %s46, %s47
      %p49 = scmp.eq.s32.totalorder %s48, 0
      %s51 = sadd.s32 %s50, 1
      %s52 = scalar_select %p49, %s50, %s51
      %p55 = pneg %p49
      %p56 = scmp.eq.s32.totalorder %s26, 1
      %p57 = por %p55, %p56
      %p58 = scmp.ne.s32.totalorder %s50, %s53
      %p59 = scmp.eq.s32.totalorder %s26, 0
      %p60 = por %p58, %p59
      %p61 = scmp.ne.s32.totalorder %s50, %s53
      %p62 = scmp.eq.s32.totalorder %s31, 1
      %p63 = por %p61, %p62
      %p64 = scmp.ne.s32.totalorder %s53, %s54
      %p65 = scmp.eq.s32.totalorder %s31, 0
      %p66 = por %p64, %p65
      %p67 = scmp.ne.s32.totalorder %s53, %s54
      %p68 = scmp.eq.s32.totalorder %s32, 1
      %p69 = por %p67, %p68
      %p71 = scmp.ne.s32.totalorder %s54, %s70
      %p72 = scmp.eq.s32.totalorder %s32, 0
      %p73 = por %p71, %p72
      %s74 = ssub.s32 %s34, %s41
      %p75 = scmp.eq.s32.totalorder %s74, 0
      %s77 = sadd.s32 %s76, 1
      %s78 = scalar_select %p75, %s76, %s77
      %p81 = pneg %p75
      %p82 = scmp.eq.s32.totalorder %s26, 1
      %p83 = por %p81, %p82
      %p84 = scmp.ne.s32.totalorder %s76, %s79
      %p85 = scmp.eq.s32.totalorder %s26, 0
      %p86 = por %p84, %p85
      %p87 = scmp.ne.s32.totalorder %s76, %s79
      %p88 = scmp.eq.s32.totalorder %s31, 1
      %p89 = por %p87, %p88
      %p90 = scmp.ne.s32.totalorder %s79, %s80
      %p91 = scmp.eq.s32.totalorder %s31, 0
      %p92 = por %p90, %p91
      %p93 = scmp.ne.s32.totalorder %s79, %s80
      %p94 = scmp.eq.s32.totalorder %s32, 1
      %p95 = por %p93, %p94
      %p97 = scmp.ne.s32.totalorder %s80, %s96
      %p98 = scmp.eq.s32.totalorder %s32, 0
      %p99 = por %p97, %p98
      %s101 = sadd.s32 %s100, 1
      %p104 = scmp.eq.s32.totalorder %s26, 1
      %p105 = scmp.ne.s32.totalorder %s100, %s102
      %p106 = scmp.eq.s32.totalorder %s26, 0
      %p107 = por %p105, %p106
      %p108 = scmp.ne.s32.totalorder %s100, %s102
      %p109 = scmp.eq.s32.totalorder %s31, 1
      %p110 = por %p108, %p109
      %p111 = scmp.ne.s32.totalorder %s102, %s103
      %p112 = scmp.eq.s32.totalorder %s31, 0
      %p113 = por %p111, %p112
      %p114 = scmp.ne.s32.totalorder %s102, %s103
      %p115 = scmp.eq.s32.totalorder %s32, 1
      %p116 = por %p114, %p115
      %p118 = scmp.ne.s32.totalorder %s103, %s117
      %p119 = scmp.eq.s32.totalorder %s32, 0
      %p120 = por %p118, %p119
      %s122 = sadd.s32 %s121, 1
      %p125 = scmp.eq.s32.totalorder %s26, 1
      %p126 = scmp.ne.s32.totalorder %s121, %s123
      %p127 = scmp.eq.s32.totalorder %s26, 0
      %p128 = por %p126, %p127
      %p129 = scmp.ne.s32.totalorder %s121, %s123
      %p130 = scmp.eq.s32.totalorder %s31, 1
      %p131 = por %p129, %p130
      %p132 = scmp.ne.s32.totalorder %s123, %s124
      %p133 = scmp.eq.s32.totalorder %s31, 0
      %p134 = por %p132, %p133
      %p135 = scmp.ne.s32.totalorder %s123, %s124
      %p136 = scmp.eq.s32.totalorder %s32, 1
      %p137 = por %p135, %p136
      %p139 = scmp.ne.s32.totalorder %s124, %s138
      %p140 = scmp.eq.s32.totalorder %s32, 0
      %p141 = por %p139, %p140
      %s143 = sadd.s32 %s142, 1
      %p146 = scmp.eq.s32.totalorder %s26, 1
      %p147 = scmp.ne.s32.totalorder %s142, %s144
      %p148 = scmp.eq.s32.totalorder %s26, 0
      %p149 = por %p147, %p148
      %p150 = scmp.ne.s32.totalorder %s142, %s144
      %p151 = scmp.eq.s32.totalorder %s31, 1
      %p152 = por %p150, %p151
      %p153 = scmp.ne.s32.totalorder %s144, %s145
      %p154 = scmp.eq.s32.totalorder %s31, 0
      %p155 = por %p153, %p154
      %p156 = scmp.ne.s32.totalorder %s144, %s145
      %p157 = scmp.eq.s32.totalorder %s32, 1
      %p158 = por %p156, %p157
      %p160 = scmp.ne.s32.totalorder %s145, %s159
      %p161 = scmp.eq.s32.totalorder %s32, 0
      %p162 = por %p160, %p161
      %s164 = sadd.s32 %s163, 1
      %p167 = scmp.eq.s32.totalorder %s26, 1
      %p168 = scmp.ne.s32.totalorder %s163, %s165
      %p169 = scmp.eq.s32.totalorder %s26, 0
      %p170 = por %p168, %p169
      %p171 = scmp.ne.s32.totalorder %s163, %s165
      %p172 = scmp.eq.s32.totalorder %s31, 1
      %p173 = por %p171, %p172
      %p174 = scmp.ne.s32.totalorder %s165, %s166
      %p175 = scmp.eq.s32.totalorder %s31, 0
      %p176 = por %p174, %p175
      %p177 = scmp.ne.s32.totalorder %s165, %s166
      %p178 = scmp.eq.s32.totalorder %s32, 1
      %p179 = por %p177, %p178
      %p181 = scmp.ne.s32.totalorder %s166, %s180
      %p182 = scmp.eq.s32.totalorder %s32, 0
      %p183 = por %p181, %p182
      %s185 = sadd.s32 %s184, 1
      %p188 = scmp.eq.s32.totalorder %s26, 1
      %p189 = scmp.ne.s32.totalorder %s184, %s186
      %p190 = scmp.eq.s32.totalorder %s26, 0
      %p191 = por %p189, %p190
      %p192 = scmp.ne.s32.totalorder %s184, %s186
      %p193 = scmp.eq.s32.totalorder %s31, 1
      %p194 = por %p192, %p193
      %p195 = scmp.ne.s32.totalorder %s186, %s187
      %p196 = scmp.eq.s32.totalorder %s31, 0
      %p197 = por %p195, %p196
      %p198 = scmp.ne.s32.totalorder %s186, %s187
      %p199 = scmp.eq.s32.totalorder %s32, 1
      %p200 = por %p198, %p199
      %p202 = scmp.ne.s32.totalorder %s187, %s201
      %p203 = scmp.eq.s32.totalorder %s32, 0
      %p204 = por %p202, %p203
      %s205 = ssub.s32 %s33, %s45
      %p206 = scmp.eq.s32.totalorder %s205, 0
      %s208 = sadd.s32 %s207, 1
      %s209 = scalar_select %p206, %s207, %s208
      %p212 = pneg %p206
      %p213 = scmp.eq.s32.totalorder %s26, 1
      %p214 = por %p212, %p213
      %p215 = scmp.ne.s32.totalorder %s207, %s210
      %p216 = scmp.eq.s32.totalorder %s26, 0
      %p217 = por %p215, %p216
      %p218 = scmp.ne.s32.totalorder %s207, %s210
      %p219 = scmp.eq.s32.totalorder %s31, 1
      %p220 = por %p218, %p219
      %p221 = scmp.ne.s32.totalorder %s210, %s211
      %p222 = scmp.eq.s32.totalorder %s31, 0
      %p223 = por %p221, %p222
      %p224 = scmp.ne.s32.totalorder %s210, %s211
      %p225 = scmp.eq.s32.totalorder %s32, 1
      %p226 = por %p224, %p225
      %p228 = scmp.ne.s32.totalorder %s211, %s227
      %p229 = scmp.eq.s32.totalorder %s32, 0
      %p230 = por %p228, %p229
      %s231 = ssub.s32 %s33, %s45
      %p232 = scmp.eq.s32.totalorder %s231, 0
      %s234 = sadd.s32 %s233, 1
      %s235 = scalar_select %p232, %s233, %s234
      %p238 = pneg %p232
      %p239 = scmp.eq.s32.totalorder %s26, 1
      %p240 = por %p238, %p239
      %p241 = scmp.ne.s32.totalorder %s233, %s236
      %p242 = scmp.eq.s32.totalorder %s26, 0
      %p243 = por %p241, %p242
      %p244 = scmp.ne.s32.totalorder %s233, %s236
      %p245 = scmp.eq.s32.totalorder %s31, 1
      %p246 = por %p244, %p245
      %p247 = scmp.ne.s32.totalorder %s236, %s237
      %p248 = scmp.eq.s32.totalorder %s31, 0
      %p249 = por %p247, %p248
      %p250 = scmp.ne.s32.totalorder %s236, %s237
      %p251 = scmp.eq.s32.totalorder %s32, 1
      %p252 = por %p250, %p251
      %p254 = scmp.ne.s32.totalorder %s237, %s253
      %p255 = scmp.eq.s32.totalorder %s32, 0
      %p256 = por %p254, %p255
      %p257 = scmp.le.s32.totalorder 1, %s26
      %p258 = scmp.lt.s32.totalorder %s26, 3
      %p259 = pnand %p257, %p258
      %p260 = pneg %p259
      // Predicated region
      $region9: #{tpu_custom_call.1} parent=5 // pred_check
        _
      $region10: #{tpu_custom_call.1} parent=5 // pred_check_branch
        %262 = sbr.rel (%p259) target = $region12
      $region11: #{tpu_custom_call.1} parent=5 // pred_region
        %s263 = ssub.s32 %s26, 1
        // Predicated region
        $region13: #{tpu_custom_call.1} parent=11 // pred_check
          %p264 = pneg %p92
        $region14: #{tpu_custom_call.1} parent=11 // pred_check_branch
          %266 = sbr.rel (%p264) target = $region16
        $region15: #{tpu_custom_call.1} parent=11 // pred_region
          %s267 = smul.u32 48, %s36
          %s269 = ssub.s32 6144, 6144
          %270 = vsyncadd [#allocation7], %s269
          %s271 = smul.addr %s267, 2
          %s272 = smul.addr %s271, 64
          %s273 = scalar_lea.hbm %s1, %s272
          %s274 = sshll.u32 [#allocation6], 4
          %s275 = int_to_ptr.vmem [resolvable:$true] %s274
          %280 = dma.hbm_to_vmem [thread:$0]  %s273, 6144, %s275, [#allocation7], 128, 128, 8
        $region16: #{tpu_custom_call.1} parent=11 // pred_fallthru
          _
        // Predicated region
        $region17: #{tpu_custom_call.1} parent=11 // pred_check
          %p281 = pneg %p113
        $region18: #{tpu_custom_call.1} parent=11 // pred_check_branch
          %283 = sbr.rel (%p281) target = $region20
        $region19: #{tpu_custom_call.1} parent=11 // pred_region
          _
        $region20: #{tpu_custom_call.1} parent=11 // pred_fallthru
          _
        // Predicated region
        $region21: #{tpu_custom_call.1} parent=11 // pred_check
          %p284 = pneg %p134
        $region22: #{tpu_custom_call.1} parent=11 // pred_check_branch
          %286 = sbr.rel (%p284) target = $region24
        $region23: #{tpu_custom_call.1} parent=11 // pred_region
          %s288 = ssub.s32 2048, 2048
          %289 = vsyncadd [#allocation7], %s288
          %s290 = sshll.u32 [#allocation8], 4
          %s291 = int_to_ptr.vmem [resolvable:$true] %s290
          %296 = dma.hbm_to_vmem [thread:$0]  %s3, 2048, %s291, [#allocation7], 64, 64, 4
        $region24: #{tpu_custom_call.1} parent=11 // pred_fallthru
          _
        // Predicated region
        $region25: #{tpu_custom_call.1} parent=11 // pred_check
          %p297 = pneg %p155
        $region26: #{tpu_custom_call.1} parent=11 // pred_check_branch
          %299 = sbr.rel (%p297) target = $region28
        $region27: #{tpu_custom_call.1} parent=11 // pred_region
          _
        $region28: #{tpu_custom_call.1} parent=11 // pred_fallthru
          _
        // Predicated region
        $region29: #{tpu_custom_call.1} parent=11 // pred_check
          %p300 = pneg %p176
        $region30: #{tpu_custom_call.1} parent=11 // pred_check_branch
          %302 = sbr.rel (%p300) target = $region32
        $region31: #{tpu_custom_call.1} parent=11 // pred_region
          %s304 = ssub.s32 1024, 1024
          %305 = vsyncadd [#allocation10], %s304
          %s306 = sshll.u32 [#allocation9], 4
          %s307 = int_to_ptr.vmem [resolvable:$true] %s306
          %312 = dma.hbm_to_vmem [thread:$0]  %s5, 1024, %s307, [#allocation10], 64, 64, 4
        $region32: #{tpu_custom_call.1} parent=11 // pred_fallthru
          _
        // Predicated region
        $region33: #{tpu_custom_call.1} parent=11 // pred_check
          %p313 = pneg %p197
        $region34: #{tpu_custom_call.1} parent=11 // pred_check_branch
          %315 = sbr.rel (%p313) target = $region36
        $region35: #{tpu_custom_call.1} parent=11 // pred_region
          _
        $region36: #{tpu_custom_call.1} parent=11 // pred_fallthru
          _
      $region12: #{tpu_custom_call.1} parent=5 // pred_fallthru
        _
      %p316 = scmp.lt.s32.totalorder %s26, 2
      // Predicated region
      $region37: #{tpu_custom_call.1} parent=5 // pred_check
        %p317 = pneg %p316
      $region38: #{tpu_custom_call.1} parent=5 // pred_check_branch
        %319 = sbr.rel (%p317) target = $region40
      $region39: #{tpu_custom_call.1} parent=5 // pred_region
        // Predicated region
        $region41: #{tpu_custom_call.1} parent=39 // pred_check
          %p320 = pneg %p60
        $region42: #{tpu_custom_call.1} parent=39 // pred_check_branch
          %322 = sbr.rel (%p320) target = $region44
        $region43: #{tpu_custom_call.1} parent=39 // pred_region
          %s323 = sand.u32 %s50, 1
          %s324 = scalar_lea.sflag [#allocation4], %s323
          %s325 = sand.u32 %s50, 1
          %s326 = smul.addr %s325, 48
          %s327 = scalar_lea.vmem [#allocation3], %s326
          %s328 = smul.u32 2, %s33
          %s329 = smul.u32 3, %s34
          %s331 = ssub.s32 768, 768
          %332 = vsyncadd %s324, %s331
          %s333 = smul.addr %s328, 3
          %s334 = sadd.s32 %s329, %s333
          %s335 = smul.addr %s334, 128
          %s336 = scalar_lea.hbm %s0, %s335
          %s337 = sshll.u32 %s327, 4
          %s338 = int_to_ptr.vmem [resolvable:$true] %s337
          %343 = dma.hbm_to_vmem [thread:$0]  %s336, 768, %s338, %s324, 384, 384, 24
        $region44: #{tpu_custom_call.1} parent=39 // pred_fallthru
          _
      $region40: #{tpu_custom_call.1} parent=5 // pred_fallthru
        _
      %p344 = scmp.le.s32.totalorder 1, %s26
      %p345 = scmp.lt.s32.totalorder %s26, 3
      %p346 = pnand %p344, %p345
      %p347 = pneg %p346
      // Predicated region
      $region45: #{tpu_custom_call.1} parent=5 // pred_check
        _
      $region46: #{tpu_custom_call.1} parent=5 // pred_check_branch
        %349 = sbr.rel (%p346) target = $region48
      $region47: #{tpu_custom_call.1} parent=5 // pred_region
        %s350 = ssub.s32 %s26, 1
        %s351 = sand.u32 %s53, 1
        %s352 = scalar_lea.sflag [#allocation4], %s351
        %s353 = sand.u32 %s53, 1
        %s354 = smul.addr %s353, 48
        %s355 = scalar_lea.vmem [#allocation3], %s354
        // Predicated region
        $region49: #{tpu_custom_call.1} parent=47 // pred_check
          %p356 = pneg %p66
        $region50: #{tpu_custom_call.1} parent=47 // pred_check_branch
          %358 = sbr.rel (%p356) target = $region52
        $region51: #{tpu_custom_call.1} parent=47 // pred_region
          %359 = dma.done %s352, 768
        $region52: #{tpu_custom_call.1} parent=47 // pred_fallthru
          _
        // Predicated region
        $region53: #{tpu_custom_call.1} parent=47 // pred_check
          %p360 = pneg %p92
        $region54: #{tpu_custom_call.1} parent=47 // pred_check_branch
          %362 = sbr.rel (%p360) target = $region56
        $region55: #{tpu_custom_call.1} parent=47 // pred_region
          %363 = dma.done [#allocation7], 6144
        $region56: #{tpu_custom_call.1} parent=47 // pred_fallthru
          _
        // Predicated region
        $region57: #{tpu_custom_call.1} parent=47 // pred_check
          %p364 = pneg %p134
        $region58: #{tpu_custom_call.1} parent=47 // pred_check_branch
          %366 = sbr.rel (%p364) target = $region60
        $region59: #{tpu_custom_call.1} parent=47 // pred_region
          %367 = dma.done [#allocation7], 2048
        $region60: #{tpu_custom_call.1} parent=47 // pred_fallthru
          _
        // Predicated region
        $region61: #{tpu_custom_call.1} parent=47 // pred_check
          %p368 = pneg %p176
        $region62: #{tpu_custom_call.1} parent=47 // pred_check_branch
          %370 = sbr.rel (%p368) target = $region64
        $region63: #{tpu_custom_call.1} parent=47 // pred_region
          %371 = dma.done [#allocation10], 1024
        $region64: #{tpu_custom_call.1} parent=47 // pred_fallthru
          _
        %s372 = sand.u32 %s53, 1
        %s373 = scalar_lea.sflag [#allocation4], %s372
        %s374 = sand.u32 %s53, 1
        %s375 = smul.addr %s374, 48
        %s376 = scalar_lea.vmem [#allocation3], %s375
        %p377 = pneg %p66
        %p378 = pneg %p63
        %p379 = pneg %p92
        %p380 = pneg %p89
        %p381 = pneg %p113
        %p382 = pneg %p110
        %p383 = pneg %p134
        %p384 = pneg %p131
        %p385 = pneg %p155
        %p386 = pneg %p152
        %p387 = pneg %p176
        %p388 = pneg %p173
        %p389 = pneg %p197
        %p390 = pneg %p194
        %p391 = pneg %p223
        %p392 = pneg %p220
        %s393 = sand.u32 %s210, 1
        %s394 = scalar_lea.sflag [#allocation5], %s393
        %s395 = sand.u32 %s210, 1
        %s396 = smul.addr %s395, 16
        %s397 = scalar_lea.vmem [#allocation11], %s396
        %p398 = pneg %p249
        %p399 = pneg %p246
        %s400 = sand.u32 %s236, 1
        %s401 = scalar_lea.sflag [#allocation13], %s400
        %s402 = sand.u32 %s236, 1
        %s403 = smul.addr %s402, 8
        %s404 = scalar_lea.vmem [#allocation12], %s403
        %s405 = smul.u32 2, %s35
        %s406 = smul.u32 3, %s36
        %s407 = smul.u32 48, %s36
        %s408 = smul.u32 2, %s35
        %s409 = smul.u32 2, %s35
        %p411 = scmp.eq.s32.totalorder %s36, 0
        // Predicated region
        $region65: #{tpu_custom_call.1} parent=47 // pred_check
          %p412 = pneg %p411
        $region66: #{tpu_custom_call.1} parent=47 // pred_check_branch
          %414 = sbr.rel (%p412) target = $region68
        $region67: #{tpu_custom_call.1} parent=47 // pred_region
          %415 = vst [vmem:[#allocation2] sm:$0xff] 0.0
          %416 = vst [vmem:[#allocation2 + $0x8] sm:$0xff] 0.0
          %417 = vst [vmem:[#allocation2 + $0x10] sm:$0xff] 0.0
          %418 = vst [vmem:[#allocation2 + $0x18] sm:$0xff] 0.0
        $region68: #{tpu_custom_call.1} parent=47 // pred_fallthru
          _
        %v419 = vld [vmem:[#allocation2] sm:$0xff]
        %v420 = vld [vmem:[#allocation2 + $0x8] sm:$0xff]
        %v421 = vld [vmem:[#allocation2 + $0x10] sm:$0xff]
        %v422 = vld [vmem:[#allocation2 + $0x18] sm:$0xff]
        %v423 = vld [vmem:[%s355] sm:$0xff]
        %v424 = vld [vmem:[%s355 + $0x8] sm:$0xff]
        %v425 = vld [vmem:[%s355 + $0x10] sm:$0xff]
        %v426 = vld [vmem:[%s355 + $0x18] sm:$0xff]
        %v427 = vld [vmem:[%s355 + $0x20] sm:$0xff]
        %v428 = vld [vmem:[%s355 + $0x28] sm:$0xff]
        %v429 = vpack.c.bf16 %v426, %v423
        %v430 = vpack.c.bf16 %v427, %v424
        %v431 = vpack.c.bf16 %v428, %v425
        %v432 = vld [vmem:[#allocation6] sm:$0xff]
        %v433 = vld [vmem:[#allocation6 + $0x8] sm:$0xff]
        %v434 = vld [vmem:[#allocation6 + $0x10] sm:$0xff]
        %v435 = vld [vmem:[#allocation6 + $0x18] sm:$0xff]
        %v436 = vld [vmem:[#allocation6 + $0x20] sm:$0xff]
        %v437 = vld [vmem:[#allocation6 + $0x28] sm:$0xff]
        %v438 = vld [vmem:[#allocation6 + $0x30] sm:$0xff]
        %v439 = vld [vmem:[#allocation6 + $0x38] sm:$0xff]
        %v440 = vld [vmem:[#allocation6 + $0x40] sm:$0xff]
        %v441 = vld [vmem:[#allocation6 + $0x48] sm:$0xff]
        %v442 = vld [vmem:[#allocation6 + $0x50] sm:$0xff]
        %v443 = vld [vmem:[#allocation6 + $0x58] sm:$0xff]
        %v444 = vld [vmem:[#allocation6 + $0x60] sm:$0xff]
        %v445 = vld [vmem:[#allocation6 + $0x68] sm:$0xff]
        %v446 = vld [vmem:[#allocation6 + $0x70] sm:$0xff]
        %v447 = vld [vmem:[#allocation6 + $0x78] sm:$0xff]
        %v448 = vld [vmem:[#allocation6 + $0x80] sm:$0xff]
        %v449 = vld [vmem:[#allocation6 + $0x88] sm:$0xff]
        %v450 = vld [vmem:[#allocation6 + $0x90] sm:$0xff]
        %v451 = vld [vmem:[#allocation6 + $0x98] sm:$0xff]
        %v452 = vld [vmem:[#allocation6 + $0xa0] sm:$0xff]
        %v453 = vld [vmem:[#allocation6 + $0xa8] sm:$0xff]
        %v454 = vld [vmem:[#allocation6 + $0xb0] sm:$0xff]
        %v455 = vld [vmem:[#allocation6 + $0xb8] sm:$0xff]
        %v456 = vld [vmem:[#allocation6 + $0xc0] sm:$0xff]
        %v457 = vld [vmem:[#allocation6 + $0xc8] sm:$0xff]
        %v458 = vld [vmem:[#allocation6 + $0xd0] sm:$0xff]
        %v459 = vld [vmem:[#allocation6 + $0xd8] sm:$0xff]
        %v460 = vld [vmem:[#allocation6 + $0xe0] sm:$0xff]
        %v461 = vld [vmem:[#allocation6 + $0xe8] sm:$0xff]
        %v462 = vld [vmem:[#allocation6 + $0xf0] sm:$0xff]
        %v463 = vld [vmem:[#allocation6 + $0xf8] sm:$0xff]
        %v464 = vld [vmem:[#allocation6 + $0x100] sm:$0xff]
        %v465 = vld [vmem:[#allocation6 + $0x108] sm:$0xff]
        %v466 = vld [vmem:[#allocation6 + $0x110] sm:$0xff]
        %v467 = vld [vmem:[#allocation6 + $0x118] sm:$0xff]
        %v468 = vld [vmem:[#allocation6 + $0x120] sm:$0xff]
        %v469 = vld [vmem:[#allocation6 + $0x128] sm:$0xff]
        %v470 = vld [vmem:[#allocation6 + $0x130] sm:$0xff]
        %v471 = vld [vmem:[#allocation6 + $0x138] sm:$0xff]
        %v472 = vld [vmem:[#allocation6 + $0x140] sm:$0xff]
        %v473 = vld [vmem:[#allocation6 + $0x148] sm:$0xff]
        %v474 = vld [vmem:[#allocation6 + $0x150] sm:$0xff]
        %v475 = vld [vmem:[#allocation6 + $0x158] sm:$0xff]
        %v476 = vld [vmem:[#allocation6 + $0x160] sm:$0xff]
        %v477 = vld [vmem:[#allocation6 + $0x168] sm:$0xff]
        %v478 = vld [vmem:[#allocation6 + $0x170] sm:$0xff]
        %v479 = vld [vmem:[#allocation6 + $0x178] sm:$0xff]
        %v528 = vunpack.c.l.b16 %v432
        %v529 = vunpack.c.h.b16 %v432
        %v530 = vunpack.c.l.b16 %v433
        %v531 = vunpack.c.h.b16 %v433
        %v532 = vunpack.c.l.b16 %v434
        %v533 = vunpack.c.h.b16 %v434
        %v534 = vunpack.c.l.b16 %v435
        %v535 = vunpack.c.h.b16 %v435
        %v536 = vunpack.c.l.b16 %v436
        %v537 = vunpack.c.h.b16 %v436
        %v538 = vunpack.c.l.b16 %v437
        %v539 = vunpack.c.h.b16 %v437
        %v540 = vunpack.c.l.b16 %v438
        %v541 = vunpack.c.h.b16 %v438
        %v542 = vunpack.c.l.b16 %v439
        %v543 = vunpack.c.h.b16 %v439
        %v544 = vunpack.c.l.b16 %v440
        %v545 = vunpack.c.h.b16 %v440
        %v546 = vunpack.c.l.b16 %v441
        %v547 = vunpack.c.h.b16 %v441
        %v548 = vunpack.c.l.b16 %v442
        %v549 = vunpack.c.h.b16 %v442
        %v550 = vunpack.c.l.b16 %v443
        %v551 = vunpack.c.h.b16 %v443
        %v552 = vunpack.c.l.b16 %v444
        %v553 = vunpack.c.h.b16 %v444
        %v554 = vunpack.c.l.b16 %v445
        %v555 = vunpack.c.h.b16 %v445
        %v556 = vunpack.c.l.b16 %v446
        %v557 = vunpack.c.h.b16 %v446
        %v558 = vunpack.c.l.b16 %v447
        %v559 = vunpack.c.h.b16 %v447
        %v560 = vunpack.c.l.b16 %v448
        %v561 = vunpack.c.h.b16 %v448
        %v562 = vunpack.c.l.b16 %v449
        %v563 = vunpack.c.h.b16 %v449
        %v564 = vunpack.c.l.b16 %v450
        %v565 = vunpack.c.h.b16 %v450
        %v566 = vunpack.c.l.b16 %v451
        %v567 = vunpack.c.h.b16 %v451
        %v568 = vunpack.c.l.b16 %v452
        %v569 = vunpack.c.h.b16 %v452
        %v570 = vunpack.c.l.b16 %v453
        %v571 = vunpack.c.h.b16 %v453
        %v572 = vunpack.c.l.b16 %v454
        %v573 = vunpack.c.h.b16 %v454
        %v574 = vunpack.c.l.b16 %v455
        %v575 = vunpack.c.h.b16 %v455
        %v576 = vunpack.c.l.b16 %v456
        %v577 = vunpack.c.h.b16 %v456
        %v578 = vunpack.c.l.b16 %v457
        %v579 = vunpack.c.h.b16 %v457
        %v580 = vunpack.c.l.b16 %v458
        %v581 = vunpack.c.h.b16 %v458
        %v582 = vunpack.c.l.b16 %v459
        %v583 = vunpack.c.h.b16 %v459
        %v584 = vunpack.c.l.b16 %v460
        %v585 = vunpack.c.h.b16 %v460
        %v586 = vunpack.c.l.b16 %v461
        %v587 = vunpack.c.h.b16 %v461
        %v588 = vunpack.c.l.b16 %v462
        %v589 = vunpack.c.h.b16 %v462
        %v590 = vunpack.c.l.b16 %v463
        %v591 = vunpack.c.h.b16 %v463
        %v592 = vunpack.c.l.b16 %v464
        %v593 = vunpack.c.h.b16 %v464
        %v594 = vunpack.c.l.b16 %v465
        %v595 = vunpack.c.h.b16 %v465
        %v596 = vunpack.c.l.b16 %v466
        %v597 = vunpack.c.h.b16 %v466
        %v598 = vunpack.c.l.b16 %v467
        %v599 = vunpack.c.h.b16 %v467
        %v600 = vunpack.c.l.b16 %v468
        %v601 = vunpack.c.h.b16 %v468
        %v602 = vunpack.c.l.b16 %v469
        %v603 = vunpack.c.h.b16 %v469
        %v604 = vunpack.c.l.b16 %v470
        %v605 = vunpack.c.h.b16 %v470
        %v606 = vunpack.c.l.b16 %v471
        %v607 = vunpack.c.h.b16 %v471
        %v608 = vunpack.c.l.b16 %v472
        %v609 = vunpack.c.h.b16 %v472
        %v610 = vunpack.c.l.b16 %v473
        %v611 = vunpack.c.h.b16 %v473
        %v612 = vunpack.c.l.b16 %v474
        %v613 = vunpack.c.h.b16 %v474
        %v614 = vunpack.c.l.b16 %v475
        %v615 = vunpack.c.h.b16 %v475
        %v616 = vunpack.c.l.b16 %v476
        %v617 = vunpack.c.h.b16 %v476
        %v618 = vunpack.c.l.b16 %v477
        %v619 = vunpack.c.h.b16 %v477
        %v620 = vunpack.c.l.b16 %v478
        %v621 = vunpack.c.h.b16 %v478
        %v622 = vunpack.c.l.b16 %v479
        %v623 = vunpack.c.h.b16 %v479
        %v624 = vpack.c.b16 %v530, %v528
        %v625 = vpack.c.b16 %v531, %v529
        %v626 = vpack.c.b16 %v534, %v532
        %v627 = vpack.c.b16 %v535, %v533
        %v628 = vpack.c.b16 %v538, %v536
        %v629 = vpack.c.b16 %v539, %v537
        %v630 = vpack.c.b16 %v542, %v540
        %v631 = vpack.c.b16 %v543, %v541
        %v632 = vpack.c.b16 %v546, %v544
        %v633 = vpack.c.b16 %v547, %v545
        %v634 = vpack.c.b16 %v550, %v548
        %v635 = vpack.c.b16 %v551, %v549
        %v636 = vpack.c.b16 %v554, %v552
        %v637 = vpack.c.b16 %v555, %v553
        %v638 = vpack.c.b16 %v558, %v556
        %v639 = vpack.c.b16 %v559, %v557
        %v640 = vpack.c.b16 %v562, %v560
        %v641 = vpack.c.b16 %v563, %v561
        %v642 = vpack.c.b16 %v566, %v564
        %v643 = vpack.c.b16 %v567, %v565
        %v644 = vpack.c.b16 %v570, %v568
        %v645 = vpack.c.b16 %v571, %v569
        %v646 = vpack.c.b16 %v574, %v572
        %v647 = vpack.c.b16 %v575, %v573
        %v648 = vpack.c.b16 %v578, %v576
        %v649 = vpack.c.b16 %v579, %v577
        %v650 = vpack.c.b16 %v582, %v580
        %v651 = vpack.c.b16 %v583, %v581
        %v652 = vpack.c.b16 %v586, %v584
        %v653 = vpack.c.b16 %v587, %v585
        %v654 = vpack.c.b16 %v590, %v588
        %v655 = vpack.c.b16 %v591, %v589
        %v656 = vpack.c.b16 %v594, %v592
        %v657 = vpack.c.b16 %v595, %v593
        %v658 = vpack.c.b16 %v598, %v596
        %v659 = vpack.c.b16 %v599, %v597
        %v660 = vpack.c.b16 %v602, %v600
        %v661 = vpack.c.b16 %v603, %v601
        %v662 = vpack.c.b16 %v606, %v604
        %v663 = vpack.c.b16 %v607, %v605
        %v664 = vpack.c.b16 %v610, %v608
        %v665 = vpack.c.b16 %v611, %v609
        %v666 = vpack.c.b16 %v614, %v612
        %v667 = vpack.c.b16 %v615, %v613
        %v668 = vpack.c.b16 %v618, %v616
        %v669 = vpack.c.b16 %v619, %v617
        %v670 = vpack.c.b16 %v622, %v620
        %v671 = vpack.c.b16 %v623, %v621
        %720 = vmatprep.subr.bf16.mxu0 %v625
        %721 = vmatpush1.bf16.msra.mxu0 %v624
        %722 = vmatprep.subr.bf16.mxu0 %v627
        %723 = vmatpush1.bf16.msra.mxu0 %v626
        %724 = vmatprep.subr.bf16.mxu0 %v629
        %725 = vmatpush1.bf16.msra.mxu0 %v628
        %726 = vmatprep.subr.bf16.mxu0 %v631
        %727 = vmatpush1.bf16.msra.mxu0 %v630
        %728 = vmatprep.subr.bf16.mxu0 %v633
        %729 = vmatpush1.bf16.msra.mxu0 %v632
        %730 = vmatprep.subr.bf16.mxu0 %v635
        %731 = vmatpush1.bf16.msra.mxu0 %v634
        %732 = vmatprep.subr.bf16.mxu0 %v637
        %733 = vmatpush1.bf16.msra.mxu0 %v636
        %734 = vmatprep.subr.bf16.mxu0 %v639
        %735 = vmatpush1.bf16.msra.mxu0 %v638
        %736 = vmatprep.subr.bf16.mxu0 %v641
        %737 = vmatpush1.bf16.msra.mxu0 %v640
        %738 = vmatprep.subr.bf16.mxu0 %v643
        %739 = vmatpush1.bf16.msra.mxu0 %v642
        %740 = vmatprep.subr.bf16.mxu0 %v645
        %741 = vmatpush1.bf16.msra.mxu0 %v644
        %742 = vmatprep.subr.bf16.mxu0 %v647
        %743 = vmatpush1.bf16.msra.mxu0 %v646
        %744 = vmatprep.subr.bf16.mxu0 %v649
        %745 = vmatpush1.bf16.msra.mxu0 %v648
        %746 = vmatprep.subr.bf16.mxu0 %v651
        %747 = vmatpush1.bf16.msra.mxu0 %v650
        %748 = vmatprep.subr.bf16.mxu0 %v653
        %749 = vmatpush1.bf16.msra.mxu0 %v652
        %750 = vmatprep.subr.bf16.mxu0 %v655
        %751 = vmatpush1.bf16.msra.mxu0 %v654
        %752 = vmatprep.mubr.bf16.mxu0 %v430
        %753 = vmatmul.mubr.bf16.gmra.mrb[0].mxu0 %v429
        %v754 = vpop.f32.mrb[0].mxu0
        %v755 = vadd.f32 0.0, %v754
        %v756 = vpop.f32.mrb[0].mxu0
        %v757 = vadd.f32 0.0, %v756
        %v758 = vpop.f32.mrb[0].mxu0
        %v759 = vadd.f32 0.0, %v758
        %v760 = vpop.f32.mrb[0].mxu0
        %v761 = vadd.f32 0.0, %v760
        %762 = vdwg.mxu0
        %763 = vmatprep.subr.bf16.mxu0 %v657
        %764 = vmatpush1.bf16.msra.mxu0 %v656
        %765 = vmatprep.subr.bf16.mxu0 %v659
        %766 = vmatpush1.bf16.msra.mxu0 %v658
        %767 = vmatprep.subr.bf16.mxu0 %v661
        %768 = vmatpush1.bf16.msra.mxu0 %v660
        %769 = vmatprep.subr.bf16.mxu0 %v663
        %770 = vmatpush1.bf16.msra.mxu0 %v662
        %771 = vmatprep.subr.bf16.mxu0 %v665
        %772 = vmatpush1.bf16.msra.mxu0 %v664
        %773 = vmatprep.subr.bf16.mxu0 %v667
        %774 = vmatpush1.bf16.msra.mxu0 %v666
        %775 = vmatprep.subr.bf16.mxu0 %v669
        %776 = vmatpush1.bf16.msra.mxu0 %v668
        %777 = vmatprep.subr.bf16.mxu0 %v671
        %778 = vmatpush1.bf16.msra.mxu0 %v670
        %779 = vmatprep.subr.bf16.mxu0 0
        %780 = vmatpush1.bf16.msra.mxu0 0
        %781 = vmatprep.subr.bf16.mxu0 0
        %782 = vmatpush1.bf16.msra.mxu0 0
        %783 = vmatprep.subr.bf16.mxu0 0
        %784 = vmatpush1.bf16.msra.mxu0 0
        %785 = vmatprep.subr.bf16.mxu0 0
        %786 = vmatpush1.bf16.msra.mxu0 0
        %787 = vmatprep.subr.bf16.mxu0 0
        %788 = vmatpush1.bf16.msra.mxu0 0
        %789 = vmatprep.subr.bf16.mxu0 0
        %790 = vmatpush1.bf16.msra.mxu0 0
        %791 = vmatprep.subr.bf16.mxu0 0
        %792 = vmatpush1.bf16.msra.mxu0 0
        %793 = vmatprep.subr.bf16.mxu0 0
        %794 = vmatpush1.bf16.msra.mxu0 0
        %795 = vmatprep.mubr.bf16.mxu0 0
        %796 = vmatmul.mubr.bf16.gmra.mrb[0].mxu0 %v431
        %v797 = vpop.f32.mrb[0].mxu0
        %v798 = vadd.f32 %v755, %v797
        %v799 = vpop.f32.mrb[0].mxu0
        %v800 = vadd.f32 %v757, %v799
        %v801 = vpop.f32.mrb[0].mxu0
        %v802 = vadd.f32 %v759, %v801
        %v803 = vpop.f32.mrb[0].mxu0
        %v804 = vadd.f32 %v761, %v803
        %805 = vdwg.mxu0
        %v806 = vadd.f32 %v419, %v798
        %v807 = vadd.f32 %v420, %v800
        %v808 = vadd.f32 %v421, %v802
        %v809 = vadd.f32 %v422, %v804
        %810 = vst [vmem:[#allocation2] sm:$0xff] %v806
        %811 = vst [vmem:[#allocation2 + $0x8] sm:$0xff] %v807
        %812 = vst [vmem:[#allocation2 + $0x10] sm:$0xff] %v808
        %813 = vst [vmem:[#allocation2 + $0x18] sm:$0xff] %v809
        // Predicated region
        $region69: #{tpu_custom_call.1} parent=47 // pred_check
          %p814 = pneg %p411
        $region70: #{tpu_custom_call.1} parent=47 // pred_check_branch
          %816 = sbr.rel (%p814) target = $region72
        $region71: #{tpu_custom_call.1} parent=47 // pred_region
          %v817 = vld [vmem:[#allocation2] sm:$0xff]
          %v818 = vld [vmem:[#allocation2 + $0x8] sm:$0xff]
          %v819 = vld [vmem:[#allocation2 + $0x10] sm:$0xff]
          %v820 = vld [vmem:[#allocation2 + $0x18] sm:$0xff]
          %v821 = vld [vmem:[%s2] sm:$0x3]
          %v823 = vlaneseq
          %v824 = vshrl.u32 %v823, 7
          %v825 = vsub.s32 0, %v824
          %v826 = vrot.slane %v821, %v825
          %v827 = vlaneseq
          %v828 = vshrl.u32 %v827, 7
          %v829 = vsub.s32 1, %v828
          %v830 = vrot.slane %v821, %v829
          %v833 = vadd.f32 %v817, %v826
          %v834 = vadd.f32 %v818, %v830
          %v835 = vadd.f32 %v819, %v826
          %v836 = vadd.f32 %v820, %v830
          %v837 = vmax.f32 %v833, 0.0
          %v838 = vmax.f32 %v834, 0.0
          %v839 = vmax.f32 %v835, 0.0
          %v840 = vmax.f32 %v836, 0.0
          %v841 = vpack.c.bf16 %v839, %v837
          %v842 = vpack.c.bf16 %v840, %v838
          %v843 = vld [vmem:[#allocation8] sm:$0xf]
          %v844 = vld [vmem:[#allocation8 + $0x4] sm:$0xf]
          %v845 = vld [vmem:[#allocation8 + $0x8] sm:$0xf]
          %v846 = vld [vmem:[#allocation8 + $0xc] sm:$0xf]
          %v847 = vld [vmem:[#allocation8 + $0x10] sm:$0xf]
          %v848 = vld [vmem:[#allocation8 + $0x14] sm:$0xf]
          %v849 = vld [vmem:[#allocation8 + $0x18] sm:$0xf]
          %v850 = vld [vmem:[#allocation8 + $0x1c] sm:$0xf]
          %v851 = vld [vmem:[#allocation8 + $0x20] sm:$0xf]
          %v852 = vld [vmem:[#allocation8 + $0x24] sm:$0xf]
          %v853 = vld [vmem:[#allocation8 + $0x28] sm:$0xf]
          %v854 = vld [vmem:[#allocation8 + $0x2c] sm:$0xf]
          %v855 = vld [vmem:[#allocation8 + $0x30] sm:$0xf]
          %v856 = vld [vmem:[#allocation8 + $0x34] sm:$0xf]
          %v857 = vld [vmem:[#allocation8 + $0x38] sm:$0xf]
          %v858 = vld [vmem:[#allocation8 + $0x3c] sm:$0xf]
          %v859 = vld [vmem:[#allocation8 + $0x40] sm:$0xf]
          %v860 = vld [vmem:[#allocation8 + $0x44] sm:$0xf]
          %v861 = vld [vmem:[#allocation8 + $0x48] sm:$0xf]
          %v862 = vld [vmem:[#allocation8 + $0x4c] sm:$0xf]
          %v863 = vld [vmem:[#allocation8 + $0x50] sm:$0xf]
          %v864 = vld [vmem:[#allocation8 + $0x54] sm:$0xf]
          %v865 = vld [vmem:[#allocation8 + $0x58] sm:$0xf]
          %v866 = vld [vmem:[#allocation8 + $0x5c] sm:$0xf]
          %v867 = vld [vmem:[#allocation8 + $0x60] sm:$0xf]
          %v868 = vld [vmem:[#allocation8 + $0x64] sm:$0xf]
          %v869 = vld [vmem:[#allocation8 + $0x68] sm:$0xf]
          %v870 = vld [vmem:[#allocation8 + $0x6c] sm:$0xf]
          %v871 = vld [vmem:[#allocation8 + $0x70] sm:$0xf]
          %v872 = vld [vmem:[#allocation8 + $0x74] sm:$0xf]
          %v873 = vld [vmem:[#allocation8 + $0x78] sm:$0xf]
          %v874 = vld [vmem:[#allocation8 + $0x7c] sm:$0xf]
          %v875 = vld [vmem:[%s4] sm:$0x1]
          %v877 = vlaneseq
          %v878 = vshrl.u32 %v877, 7
          %v879 = vsub.s32 0, %v878
          %v880 = vrot.slane %v875, %v879
          %v914 = vunpack.c.l.b16 %v843
          %v915 = vunpack.c.l.b16 %v844
          %v916 = vunpack.c.l.b16 %v845
          %v917 = vunpack.c.l.b16 %v846
          %v918 = vunpack.c.l.b16 %v847
          %v919 = vunpack.c.l.b16 %v848
          %v920 = vunpack.c.l.b16 %v849
          %v921 = vunpack.c.l.b16 %v850
          %v922 = vunpack.c.l.b16 %v851
          %v923 = vunpack.c.l.b16 %v852
          %v924 = vunpack.c.l.b16 %v853
          %v925 = vunpack.c.l.b16 %v854
          %v926 = vunpack.c.l.b16 %v855
          %v927 = vunpack.c.l.b16 %v856
          %v928 = vunpack.c.l.b16 %v857
          %v929 = vunpack.c.l.b16 %v858
          %v930 = vunpack.c.l.b16 %v859
          %v931 = vunpack.c.l.b16 %v860
          %v932 = vunpack.c.l.b16 %v861
          %v933 = vunpack.c.l.b16 %v862
          %v934 = vunpack.c.l.b16 %v863
          %v935 = vunpack.c.l.b16 %v864
          %v936 = vunpack.c.l.b16 %v865
          %v937 = vunpack.c.l.b16 %v866
          %v938 = vunpack.c.l.b16 %v867
          %v939 = vunpack.c.l.b16 %v868
          %v940 = vunpack.c.l.b16 %v869
          %v941 = vunpack.c.l.b16 %v870
          %v942 = vunpack.c.l.b16 %v871
          %v943 = vunpack.c.l.b16 %v872
          %v944 = vunpack.c.l.b16 %v873
          %v945 = vunpack.c.l.b16 %v874
          %v946 = vpack.c.b16 %v915, %v914
          %v947 = vpack.c.b16 %v917, %v916
          %v948 = vpack.c.b16 %v919, %v918
          %v949 = vpack.c.b16 %v921, %v920
          %v950 = vpack.c.b16 %v923, %v922
          %v951 = vpack.c.b16 %v925, %v924
          %v952 = vpack.c.b16 %v927, %v926
          %v953 = vpack.c.b16 %v929, %v928
          %v954 = vpack.c.b16 %v931, %v930
          %v955 = vpack.c.b16 %v933, %v932
          %v956 = vpack.c.b16 %v935, %v934
          %v957 = vpack.c.b16 %v937, %v936
          %v958 = vpack.c.b16 %v939, %v938
          %v959 = vpack.c.b16 %v941, %v940
          %v960 = vpack.c.b16 %v943, %v942
          %v961 = vpack.c.b16 %v945, %v944
          %978 = vmatprep.subr.bf16.mxu0 0
          %979 = vmatpush1.bf16.msra.mxu0 %v946
          %980 = vmatprep.subr.bf16.mxu0 0
          %981 = vmatpush1.bf16.msra.mxu0 %v947
          %982 = vmatprep.subr.bf16.mxu0 0
          %983 = vmatpush1.bf16.msra.mxu0 %v948
          %984 = vmatprep.subr.bf16.mxu0 0
          %985 = vmatpush1.bf16.msra.mxu0 %v949
          %986 = vmatprep.subr.bf16.mxu0 0
          %987 = vmatpush1.bf16.msra.mxu0 %v950
          %988 = vmatprep.subr.bf16.mxu0 0
          %989 = vmatpush1.bf16.msra.mxu0 %v951
          %990 = vmatprep.subr.bf16.mxu0 0
          %991 = vmatpush1.bf16.msra.mxu0 %v952
          %992 = vmatprep.subr.bf16.mxu0 0
          %993 = vmatpush1.bf16.msra.mxu0 %v953
          %994 = vmatprep.subr.bf16.mxu0 0
          %995 = vmatpush1.bf16.msra.mxu0 %v954
          %996 = vmatprep.subr.bf16.mxu0 0
          %997 = vmatpush1.bf16.msra.mxu0 %v955
          %998 = vmatprep.subr.bf16.mxu0 0
          %999 = vmatpush1.bf16.msra.mxu0 %v956
          %1000 = vmatprep.subr.bf16.mxu0 0
          %1001 = vmatpush1.bf16.msra.mxu0 %v957
          %1002 = vmatprep.subr.bf16.mxu0 0
          %1003 = vmatpush1.bf16.msra.mxu0 %v958
          %1004 = vmatprep.subr.bf16.mxu0 0
          %1005 = vmatpush1.bf16.msra.mxu0 %v959
          %1006 = vmatprep.subr.bf16.mxu0 0
          %1007 = vmatpush1.bf16.msra.mxu0 %v960
          %1008 = vmatprep.subr.bf16.mxu0 0
          %1009 = vmatpush1.bf16.msra.mxu0 %v961
          %1010 = vmatprep.mubr.bf16.mxu0 %v842
          %1011 = vmatmul.mubr.bf16.gmra.mrb[0].mxu0 %v841
          %v1012 = vpop.f32.mrb[0].mxu0
          %v1013 = vadd.f32 %v880, %v1012
          %v1014 = vpop.f32.mrb[0].mxu0
          %v1015 = vpop.f32.mrb[0].mxu0
          %v1016 = vadd.f32 %v880, %v1015
          %v1017 = vpop.f32.mrb[0].mxu0
          %1018 = vdwg.mxu0
          %v1019 = vmax.f32 %v1013, 0.0
          %v1020 = vmax.f32 %v1016, 0.0
          %v1021 = vpack.c.bf16 %v1020, %v1019
          %v1022 = vld [vmem:[#allocation9] sm:$0xf]
          %v1023 = vld [vmem:[#allocation9 + $0x4] sm:$0xf]
          %v1024 = vld [vmem:[#allocation9 + $0x8] sm:$0xf]
          %v1025 = vld [vmem:[#allocation9 + $0xc] sm:$0xf]
          %v1026 = vld [vmem:[#allocation9 + $0x10] sm:$0xf]
          %v1027 = vld [vmem:[#allocation9 + $0x14] sm:$0xf]
          %v1028 = vld [vmem:[#allocation9 + $0x18] sm:$0xf]
          %v1029 = vld [vmem:[#allocation9 + $0x1c] sm:$0xf]
          %v1030 = vld [vmem:[#allocation9 + $0x20] sm:$0xf]
          %v1031 = vld [vmem:[#allocation9 + $0x24] sm:$0xf]
          %v1032 = vld [vmem:[#allocation9 + $0x28] sm:$0xf]
          %v1033 = vld [vmem:[#allocation9 + $0x2c] sm:$0xf]
          %v1034 = vld [vmem:[#allocation9 + $0x30] sm:$0xf]
          %v1035 = vld [vmem:[#allocation9 + $0x34] sm:$0xf]
          %v1036 = vld [vmem:[#allocation9 + $0x38] sm:$0xf]
          %v1037 = vld [vmem:[#allocation9 + $0x3c] sm:$0xf]
          %v1038 = vld [vmem:[%s6] sm:$0x1]
          %v1040 = vlaneseq
          %v1041 = vshrl.u32 %v1040, 7
          %v1042 = vsub.s32 0, %v1041
          %v1043 = vrot.slane %v1038, %v1042
          %v1061 = vunpack.c.l.b16 %v1022
          %v1062 = vunpack.c.l.b16 %v1023
          %v1063 = vunpack.c.l.b16 %v1024
          %v1064 = vunpack.c.l.b16 %v1025
          %v1065 = vunpack.c.l.b16 %v1026
          %v1066 = vunpack.c.l.b16 %v1027
          %v1067 = vunpack.c.l.b16 %v1028
          %v1068 = vunpack.c.l.b16 %v1029
          %v1069 = vunpack.c.l.b16 %v1030
          %v1070 = vunpack.c.l.b16 %v1031
          %v1071 = vunpack.c.l.b16 %v1032
          %v1072 = vunpack.c.l.b16 %v1033
          %v1073 = vunpack.c.l.b16 %v1034
          %v1074 = vunpack.c.l.b16 %v1035
          %v1075 = vunpack.c.l.b16 %v1036
          %v1076 = vunpack.c.l.b16 %v1037
          %v1077 = vpack.c.b16 %v1062, %v1061
          %v1078 = vpack.c.b16 %v1064, %v1063
          %v1079 = vpack.c.b16 %v1066, %v1065
          %v1080 = vpack.c.b16 %v1068, %v1067
          %v1081 = vpack.c.b16 %v1070, %v1069
          %v1082 = vpack.c.b16 %v1072, %v1071
          %v1083 = vpack.c.b16 %v1074, %v1073
          %v1084 = vpack.c.b16 %v1076, %v1075
          %1093 = vmatprep.subr.bf16.mxu0 0
          %1094 = vmatpush1.bf16.msra.mxu0 %v1077
          %1095 = vmatprep.subr.bf16.mxu0 0
          %1096 = vmatpush1.bf16.msra.mxu0 %v1078
          %1097 = vmatprep.subr.bf16.mxu0 0
          %1098 = vmatpush1.bf16.msra.mxu0 %v1079
          %1099 = vmatprep.subr.bf16.mxu0 0
          %1100 = vmatpush1.bf16.msra.mxu0 %v1080
          %1101 = vmatprep.subr.bf16.mxu0 0
          %1102 = vmatpush1.bf16.msra.mxu0 %v1081
          %1103 = vmatprep.subr.bf16.mxu0 0
          %1104 = vmatpush1.bf16.msra.mxu0 %v1082
          %1105 = vmatprep.subr.bf16.mxu0 0
          %1106 = vmatpush1.bf16.msra.mxu0 %v1083
          %1107 = vmatprep.subr.bf16.mxu0 0
          %1108 = vmatpush1.bf16.msra.mxu0 %v1084
          %1109 = vmatprep.subr.bf16.mxu0 0
          %1110 = vmatpush1.bf16.msra.mxu0 0
          %1111 = vmatprep.subr.bf16.mxu0 0
          %1112 = vmatpush1.bf16.msra.mxu0 0
          %1113 = vmatprep.subr.bf16.mxu0 0
          %1114 = vmatpush1.bf16.msra.mxu0 0
          %1115 = vmatprep.subr.bf16.mxu0 0
          %1116 = vmatpush1.bf16.msra.mxu0 0
          %1117 = vmatprep.subr.bf16.mxu0 0
          %1118 = vmatpush1.bf16.msra.mxu0 0
          %1119 = vmatprep.subr.bf16.mxu0 0
          %1120 = vmatpush1.bf16.msra.mxu0 0
          %1121 = vmatprep.subr.bf16.mxu0 0
          %1122 = vmatpush1.bf16.msra.mxu0 0
          %1123 = vmatprep.subr.bf16.mxu0 0
          %1124 = vmatpush1.bf16.msra.mxu0 0
          %1125 = vmatprep.mubr.bf16.mxu0 0
          %1126 = vmatmul.mubr.bf16.gmra.mrb[0].mxu0 %v1021
          %v1127 = vpop.f32.mrb[0].mxu0
          %v1128 = vadd.f32 %v1043, %v1127
          %v1129 = vpop.f32.mrb[0].mxu0
          %v1130 = vpop.f32.mrb[0].mxu0
          %v1131 = vadd.f32 %v1043, %v1130
          %v1132 = vpop.f32.mrb[0].mxu0
          %1133 = vdwg.mxu0
          %1134 = vst [vmem:[%s397] sm:$0xff] %v1128
          %1135 = vst [vmem:[%s397 + $0x8] sm:$0xff] %v1131
          %v1137 = vunpack.c.l.b16 %v1021
          %v1138 = vunpack.c.h.b16 %v1021
          %v1139 = vpack.c.b16 %v1137, %v1137
          %v1140 = vpack.c.b16 %v1138, %v1138
          %1143 = vst [vmem:[%s404] sm:$0xf] %v1139
          %1144 = vst [vmem:[%s404 + $0x4] sm:$0xf] %v1140
        $region72: #{tpu_custom_call.1} parent=47 // pred_fallthru
          _
        %s1145 = sand.u32 %s210, 1
        %s1146 = scalar_lea.sflag [#allocation5], %s1145
        %s1147 = sand.u32 %s210, 1
        %s1148 = smul.addr %s1147, 16
        %s1149 = scalar_lea.vmem [#allocation11], %s1148
        %s1150 = sand.u32 %s236, 1
        %s1151 = scalar_lea.sflag [#allocation13], %s1150
        %s1152 = sand.u32 %s236, 1
        %s1153 = smul.addr %s1152, 8
        %s1154 = scalar_lea.vmem [#allocation12], %s1153
        // Predicated region
        $region73: #{tpu_custom_call.1} parent=47 // pred_check
          %p1155 = pneg %p220
        $region74: #{tpu_custom_call.1} parent=47 // pred_check_branch
          %1157 = sbr.rel (%p1155) target = $region76
        $region75: #{tpu_custom_call.1} parent=47 // pred_region
          %s1158 = smul.u32 2, %s35
          %s1160 = ssub.s32 256, 256
          %1161 = vsyncadd %s1146, %s1160
          %s1162 = smul.addr %s1158, 128
          %s1163 = scalar_lea.hbm %s7, %s1162
          %s1164 = sshll.u32 %s1149, 4
          %s1165 = int_to_ptr.vmem [resolvable:$true] %s1164
          %1170 = dma.vmem_to_hbm [thread:$0]  %s1165, 256, %s1163, %s1146, 128, 128, 8
        $region76: #{tpu_custom_call.1} parent=47 // pred_fallthru
          _
        // Predicated region
        $region77: #{tpu_custom_call.1} parent=47 // pred_check
          %p1171 = pneg %p246
        $region78: #{tpu_custom_call.1} parent=47 // pred_check_branch
          %1173 = sbr.rel (%p1171) target = $region80
        $region79: #{tpu_custom_call.1} parent=47 // pred_region
          %s1174 = smul.u32 2, %s35
          %s1176 = ssub.s32 128, 128
          %1177 = vsyncadd %s1151, %s1176
          %s1178 = smul.addr %s1174, 64
          %s1179 = scalar_lea.hbm %s8, %s1178
          %s1180 = sshll.u32 %s1154, 4
          %s1181 = int_to_ptr.vmem [resolvable:$true] %s1180
          %1186 = dma.vmem_to_hbm [thread:$0]  %s1181, 128, %s1179, %s1151, 64, 64, 4
        $region80: #{tpu_custom_call.1} parent=47 // pred_fallthru
          _
      $region48: #{tpu_custom_call.1} parent=5 // pred_fallthru
        _
      %p1187 = scmp.le.s32.totalorder 2, %s26
      // Predicated region
      $region81: #{tpu_custom_call.1} parent=5 // pred_check
        %p1188 = pneg %p1187
      $region82: #{tpu_custom_call.1} parent=5 // pred_check_branch
        %1190 = sbr.rel (%p1188) target = $region84
      $region83: #{tpu_custom_call.1} parent=5 // pred_region
        %s1191 = ssub.s32 %s26, 2
        // Predicated region
        $region85: #{tpu_custom_call.1} parent=83 // pred_check
          %p1192 = pneg %p226
        $region86: #{tpu_custom_call.1} parent=83 // pred_check_branch
          %1194 = sbr.rel (%p1192) target = $region88
        $region87: #{tpu_custom_call.1} parent=83 // pred_region
          %s1195 = sand.u32 %s211, 1
          %s1196 = scalar_lea.sflag [#allocation5], %s1195
          %s1197 = sand.u32 %s211, 1
          %s1198 = smul.addr %s1197, 16
          %s1199 = scalar_lea.vmem [#allocation11], %s1198
          %1200 = dma.done %s1196, 256
        $region88: #{tpu_custom_call.1} parent=83 // pred_fallthru
          _
        // Predicated region
        $region89: #{tpu_custom_call.1} parent=83 // pred_check
          %p1201 = pneg %p252
        $region90: #{tpu_custom_call.1} parent=83 // pred_check_branch
          %1203 = sbr.rel (%p1201) target = $region92
        $region91: #{tpu_custom_call.1} parent=83 // pred_region
          %s1204 = sand.u32 %s237, 1
          %s1205 = scalar_lea.sflag [#allocation13], %s1204
          %s1206 = sand.u32 %s237, 1
          %s1207 = smul.addr %s1206, 8
          %s1208 = scalar_lea.vmem [#allocation12], %s1207
          %1209 = dma.done %s1205, 128
        $region92: #{tpu_custom_call.1} parent=83 // pred_fallthru
          _
      $region84: #{tpu_custom_call.1} parent=5 // pred_fallthru
        _
    $region6: #{tpu_custom_call.1} parent=1 // loop_footer
      %s30 = sadd.s32 1, %s26
    $region7: #{tpu_custom_call.1} parent=1 // loop_footer_branch
      %25 = sbr.rel target = $region3
    $region8: #{tpu_custom_call.1} parent=1 // loop_exit
      _
    %1210 = vsyncpa [#allocation4], 1
    %s1211 = scalar_lea.sflag [#allocation4], 1
    %1212 = vsyncpa %s1211, 1
    %1213 = vsyncpa [#allocation7], 1
    %1214 = vsyncpa [#allocation10], 1
    %1215 = vsyncpa [#allocation5], 1
    %s1216 = scalar_lea.sflag [#allocation5], 1
    %1217 = vsyncpa %s1216, 1
    %1218 = vsyncpa [#allocation13], 1
    %s1219 = scalar_lea.sflag [#allocation13], 1
    %1220 = vsyncpa %s1219, 1

</llo_original>
